<compile_context>
chip_gen: v7x
topology: tpu7x:2x2x1
jax: 0.10.0
libtpu: 0.0.40
codegen_flags: <defaults>
</compile_context>

<pallas_src>
import jax
import jax.numpy as jnp
from jax.experimental import pallas as pl
from jax.experimental.pallas import tpu as pltpu


def _round_up(x, m):
    return (x + m - 1) // m * m


def _head_kernel(x_ref, w1_ref, b1_ref, w2_ref, b2_ref, o_ref):
    # x_ref: (TM, H_pad) bf16, w1_ref: (H_pad, H2_pad) bf16, b1_ref: (1, H2_pad) f32,
    # w2_ref: (H2_pad, TOUT_pad) bf16 (sub|obj heads packed), b2_ref: (1, TOUT_pad) f32.
    h = jnp.dot(x_ref[...], w1_ref[...],
                preferred_element_type=jnp.float32)          # (TM, H2_pad) f32 acc
    h = jnp.maximum(h + b1_ref[...], 0.0)                    # bias + ReLU in f32
    # Dropout (eval/inference mode) == identity.
    h = h.astype(w2_ref.dtype)                               # bf16 for second MXU matmul
    out = jnp.dot(h, w2_ref[...],
                  preferred_element_type=jnp.float32)        # (TM, TOUT_pad) f32 acc
    o_ref[...] = (out + b2_ref[...]).astype(o_ref.dtype)


def sequence_label_for_ao(x, w1, b1, w_sub, b_sub, w_obj, b_obj,
                          compute_dtype=jnp.bfloat16,
                          vmem_budget=24 << 20):
    """x: (..., H) float32. Returns (sub_output, obj_output) with last dim = tag_size."""
    orig_shape = x.shape
    H = orig_shape[-1]
    x2d = x.reshape(-1, H).astype(jnp.float32)
    M = x2d.shape[0]
    H2 = w1.shape[1]
    T_sub = w_sub.shape[1]
    T_obj = w_obj.shape[1]

    # Lane/sublane-friendly padded dims (zero-filled so padding never leaks).
    H_pad = _round_up(H, 128)
    H2_pad = _round_up(H2, 128)
    T_pad = _round_up(max(T_sub, T_obj), 128)
    TOUT_pad = 2 * T_pad          # [sub head | obj head], each lane-dense

    in_bytes = jnp.dtype(compute_dtype).itemsize
    # VMEM budget: resident weights/biases + double-buffered x & out tiles + f32 h/out.
    resident = (H_pad * H2_pad + H2_pad * TOUT_pad) * in_bytes + (H2_pad + TOUT_pad) * 4
    per_row = 2 * H_pad * in_bytes + 2 * TOUT_pad * 4 + H2_pad * 4 + TOUT_pad * 4
    avail = max(vmem_budget - resident, per_row * 16)
    tm_cap = max(16, min(1024, (avail // per_row) // 16 * 16))
    TM = min(tm_cap, _round_up(M, 16))
    M_pad = _round_up(M, TM)

    # Zero-padded, lane-dense operands; matmul operands cast to bf16.
    xp = jnp.zeros((M_pad, H_pad), jnp.float32).at[:M, :H].set(x2d).astype(compute_dtype)
    w1p = jnp.zeros((H_pad, H2_pad), jnp.float32).at[:H, :H2].set(w1).astype(compute_dtype)
    b1p = jnp.zeros((1, H2_pad), jnp.float32).at[0, :H2].set(b1)
    w2p = (jnp.zeros((H2_pad, TOUT_pad), jnp.float32)
           .at[:H2, :T_sub].set(w_sub)
           .at[:H2, T_pad:T_pad + T_obj].set(w_obj)
           .astype(compute_dtype))
    b2p = (jnp.zeros((1, TOUT_pad), jnp.float32)
           .at[0, :T_sub].set(b_sub)
           .at[0, T_pad:T_pad + T_obj].set(b_obj))

    grid = (M_pad // TM,)

    flops = 2 * M * H * H2 + 2 * M * H2 * (T_sub + T_obj)
    bytes_accessed = (xp.size * in_bytes + w1p.size * in_bytes + w2p.size * in_bytes
                      + b1p.size * 4 + b2p.size * 4 + M_pad * TOUT_pad * 4)
    cost = pl.CostEstimate(flops=flops, transcendentals=0,
                           bytes_accessed=bytes_accessed)

    out = pl.pallas_call(
        _head_kernel,
        out_shape=jax.ShapeDtypeStruct((M_pad, TOUT_pad), jnp.float32),
        grid=grid,
        in_specs=[
            pl.BlockSpec((TM, H_pad), lambda i: (i, 0)),        # streamed over M
            pl.BlockSpec((H_pad, H2_pad), lambda i: (0, 0)),    # resident weights
            pl.BlockSpec((1, H2_pad), lambda i: (0, 0)),
            pl.BlockSpec((H2_pad, TOUT_pad), lambda i: (0, 0)),
            pl.BlockSpec((1, TOUT_pad), lambda i: (0, 0)),
        ],
        out_specs=pl.BlockSpec((TM, TOUT_pad), lambda i: (i, 0)),
        compiler_params=pltpu.CompilerParams(
            dimension_semantics=("parallel",)),
        cost_estimate=cost,
    )(xp, w1p, b1p, w2p, b2p)

    sub = out[:M, :T_sub].reshape(*orig_shape[:-1], T_sub)
    obj = out[:M, T_pad:T_pad + T_obj].reshape(*orig_shape[:-1], T_obj)
    return sub, obj


def init_params(key, hidden_size, tag_size):
    """Mirror PyTorch nn.Linear init; weights stored transposed (in, out) for x @ W."""
    h2 = hidden_size // 2
    k = jax.random.split(key, 6)
    bound1 = 1.0 / (hidden_size ** 0.5)
    bound2 = 1.0 / (h2 ** 0.5)
    w1 = jax.random.uniform(k[0], (hidden_size, h2), jnp.float32, -bound1, bound1)
    b1 = jax.random.uniform(k[1], (h2,), jnp.float32, -bound1, bound1)
    w_sub = jax.random.uniform(k[2], (h2, tag_size), jnp.float32, -bound2, bound2)
    b_sub = jax.random.uniform(k[3], (tag_size,), jnp.float32, -bound2, bound2)
    w_obj = jax.random.uniform(k[4], (h2, tag_size), jnp.float32, -bound2, bound2)
    b_obj = jax.random.uniform(k[5], (tag_size,), jnp.float32, -bound2, bound2)
    return w1, b1, w_sub, b_sub, w_obj, b_obj


if __name__ == "__main__":
    batch, seq, hidden_size, tag_size = 2, 8, 32, 3
    dropout_rate = 0.5  # eval-mode identity

    key = jax.random.PRNGKey(0)
    kx, kp = jax.random.split(key)
    x = jax.random.normal(kx, (batch, seq, hidden_size), jnp.float32)
    params = init_params(kp, hidden_size, tag_size)

    sub, obj = sequence_label_for_ao(x, *params)
    sub, obj = jax.block_until_ready((sub, obj))

    # Pure-JAX f32 reference (bf16 matmuls with f32 accumulation => loosened tolerance).
    w1, b1, w_sub, b_sub, w_obj, b_obj = params
    h_ref = jnp.maximum(x @ w1 + b1, 0.0)
    sub_ref = h_ref @ w_sub + b_sub
    obj_ref = h_ref @ w_obj + b_obj

    assert sub.shape == (batch, seq, tag_size), sub.shape
    assert obj.shape == (batch, seq, tag_size), obj.shape
    assert jnp.allclose(sub, sub_ref, atol=5e-2, rtol=5e-2), "sub head mismatch vs reference"
    assert jnp.allclose(obj, obj_ref, atol=5e-2, rtol=5e-2), "obj head mismatch vs reference"

    print("KERNEL_OK")
</pallas_src>

<mosaic_0001>
module attributes {stable_mosaic.version = 11 : i64} {
  func.func @_head_kernel(%arg0: i32, %arg1: memref<16x128xbf16, #tpu.memory_space<vmem>>, %arg2: memref<128x128xbf16, #tpu.memory_space<vmem>>, %arg3: memref<1x128xf32, #tpu.memory_space<vmem>>, %arg4: memref<128x256xbf16, #tpu.memory_space<vmem>>, %arg5: memref<1x256xf32, #tpu.memory_space<vmem>>, %arg6: memref<16x256xf32, #tpu.memory_space<vmem>>) attributes {dimension_semantics = [#tpu.dimension_semantics<parallel>], iteration_bounds = array<i64: 1>, scalar_prefetch = 0 : i64, scratch_operands = 0 : i64, tpu.core_type = #tpu.core_type<tc>, window_params = [{transform_indices = @transform_0, window_bounds = array<i64: 16, 128>}, {pipeline_mode = #tpu.pipeline_mode<synchronous>, transform_indices = @transform_1, window_bounds = array<i64: 128, 128>}, {pipeline_mode = #tpu.pipeline_mode<synchronous>, transform_indices = @transform_2, window_bounds = array<i64: 1, 128>}, {pipeline_mode = #tpu.pipeline_mode<synchronous>, transform_indices = @transform_3, window_bounds = array<i64: 128, 256>}, {pipeline_mode = #tpu.pipeline_mode<synchronous>, transform_indices = @transform_4, window_bounds = array<i64: 1, 256>}, {transform_indices = @transform_5, window_bounds = array<i64: 16, 256>}]} {
    %c0 = arith.constant 0 : index
    %c0_0 = arith.constant 0 : index
    %0 = vector.load %arg1[%c0, %c0_0] : memref<16x128xbf16, #tpu.memory_space<vmem>>, vector<16x128xbf16>
    %c0_1 = arith.constant 0 : index
    %c0_2 = arith.constant 0 : index
    %1 = vector.load %arg2[%c0_1, %c0_2] : memref<128x128xbf16, #tpu.memory_space<vmem>>, vector<128x128xbf16>
    %cst = arith.constant dense<0.000000e+00> : vector<16x128xf32>
    %2 = tpu.matmul %0, %1, %cst {dimension_numbers = #tpu.dot_dimension_numbers<[1], [0], [0], [1], [0, 0, 1, 1], [], []>} : vector<16x128xbf16>, vector<128x128xbf16>, vector<16x128xf32> -> vector<16x128xf32>
    %c0_3 = arith.constant 0 : index
    %c0_4 = arith.constant 0 : index
    %3 = vector.load %arg3[%c0_3, %c0_4] : memref<1x128xf32, #tpu.memory_space<vmem>>, vector<1x128xf32>
    %4 = vector.broadcast %3 : vector<1x128xf32> to vector<16x128xf32>
    %5 = arith.addf %2, %4 : vector<16x128xf32>
    %cst_5 = arith.constant 0.000000e+00 : f32
    %6 = vector.broadcast %cst_5 : f32 to vector<16x128xf32>
    %7 = arith.maximumf %5, %6 : vector<16x128xf32>
    %8 = arith.truncf %7 : vector<16x128xf32> to vector<16x128xbf16>
    %c0_6 = arith.constant 0 : index
    %c0_7 = arith.constant 0 : index
    %9 = vector.load %arg4[%c0_6, %c0_7] : memref<128x256xbf16, #tpu.memory_space<vmem>>, vector<128x256xbf16>
    %cst_8 = arith.constant dense<0.000000e+00> : vector<16x256xf32>
    %10 = tpu.matmul %8, %9, %cst_8 {dimension_numbers = #tpu.dot_dimension_numbers<[1], [0], [0], [1], [0, 0, 1, 1], [], []>} : vector<16x128xbf16>, vector<128x256xbf16>, vector<16x256xf32> -> vector<16x256xf32>
    %c0_9 = arith.constant 0 : index
    %c0_10 = arith.constant 0 : index
    %11 = vector.load %arg5[%c0_9, %c0_10] : memref<1x256xf32, #tpu.memory_space<vmem>>, vector<1x256xf32>
    %12 = vector.broadcast %11 : vector<1x256xf32> to vector<16x256xf32>
    %13 = arith.addf %10, %12 : vector<16x256xf32>
    %c0_11 = arith.constant 0 : index
    %c0_12 = arith.constant 0 : index
    %14 = vector.load %arg6[%c0_11, %c0_12] : memref<16x256xf32, #tpu.memory_space<vmem>>, vector<16x256xf32>
    tpu.vector_store %arg6[%c0_11, %c0_12], %13 {strides = array<i32>} : memref<16x256xf32, #tpu.memory_space<vmem>>, vector<16x256xf32>,
    return
  }
  func.func @transform_0(%arg0: i32) -> (i32, i32) {
    %c0_i32 = arith.constant 0 : i32
    %c0_i32_0 = arith.constant 0 : i32
    return %arg0, %c0_i32 : i32, i32
  }
  func.func @transform_1(%arg0: i32) -> (i32, i32) {
    %c0_i32 = arith.constant 0 : i32
    %c0_i32_0 = arith.constant 0 : i32
    %c0_i32_1 = arith.constant 0 : i32
    return %c0_i32, %c0_i32_0 : i32, i32
  }
  func.func @transform_2(%arg0: i32) -> (i32, i32) {
    %c0_i32 = arith.constant 0 : i32
    %c0_i32_0 = arith.constant 0 : i32
    %c0_i32_1 = arith.constant 0 : i32
    return %c0_i32, %c0_i32_0 : i32, i32
  }
  func.func @transform_3(%arg0: i32) -> (i32, i32) {
    %c0_i32 = arith.constant 0 : i32
    %c0_i32_0 = arith.constant 0 : i32
    %c0_i32_1 = arith.constant 0 : i32
    return %c0_i32, %c0_i32_0 : i32, i32
  }
  func.func @transform_4(%arg0: i32) -> (i32, i32) {
    %c0_i32 = arith.constant 0 : i32
    %c0_i32_0 = arith.constant 0 : i32
    %c0_i32_1 = arith.constant 0 : i32
    return %c0_i32, %c0_i32_0 : i32, i32
  }
  func.func @transform_5(%arg0: i32) -> (i32, i32) {
    %c0_i32 = arith.constant 0 : i32
    %c0_i32_0 = arith.constant 0 : i32
    return %arg0, %c0_i32 : i32, i32
  }
}

</mosaic_0001>

<llo_original>
// kernel: tpu_custom_call.1
$region0: #{tpu_custom_call.1}
  #allocation0 [shape = 'u32[]', space=smem, size = 0x4, offset = 0x4, fixed_abs, tag = 'smem constant byte address 0x4 - core index']
  #allocation1 [shape = 'u32[144,128]{1,0:T(1,128)}', space=vmem, size = 0x12000, scoped, tag = 'internal scratch']
  %s0 = inlined_call_operand.hbm [shape: bf16[16,128], index: 0, kind: input, shape index: {}]
  %s1 = inlined_call_operand.hbm [shape: bf16[128,128], index: 1, kind: input, shape index: {}]
  %s2 = inlined_call_operand.vmem [shape: f32[1,128], index: 2, kind: input, shape index: {}]
  %s3 = inlined_call_operand.hbm [shape: bf16[128,256], index: 3, kind: input, shape index: {}]
  %s4 = inlined_call_operand.vmem [shape: f32[1,256], index: 4, kind: input, shape index: {}]
  %s5 = inlined_call_operand.hbm [shape: f32[16,256], index: 5, kind: output, shape index: {}]
  %s6 = sld [smem:[#allocation0]]
  $region42: #{tpu_custom_call.1} parent=0
    _
  %s8 = ssub.s32 1, %s6
  %s9 = scalar_select 0, %s8, %s6
  $region1: #{tpu_custom_call.1} parent=0
    #allocation2 [shape = 'u8[4096]{0}', space=vmem, size = 0x1000, scoped, tag = 'input window, operand 0, single buffered']
    #allocation3 [shape = 's32[1]{0}', space=sflag, size = 0x4, scoped, tag = 'scoped memory for tpu_custom_call.1']
    #allocation4 [shape = 's32[1]{0}', space=sflag, size = 0x4, scoped, tag = 'scoped memory for tpu_custom_call.1']
    #allocation5 [shape = 'u8[32768]{0}', space=vmem, size = 0x8000, scoped, tag = 'input window, operand 1, single buffered']
    #allocation6 [shape = 's32[1]{0}', space=sflag, size = 0x4, scoped, tag = 'scoped memory for tpu_custom_call.1']
    #allocation7 [shape = 'u8[65536]{0}', space=vmem, size = 0x10000, scoped, tag = 'input window, operand 3, single buffered']
    #allocation8 [shape = 'u8[16384]{0}', space=vmem, size = 0x4000, scoped, tag = 'output window, operand 0, single buffered']
    %10 = vsyncpa [#allocation3], 0
    %11 = vsyncpa [#allocation6], 0
    %12 = vsyncpa [#allocation4], 0
    // Predicated region
    $region2: #{tpu_custom_call.1} parent=1 // pred_check
      _
    $region3: #{tpu_custom_call.1} parent=1 // pred_check_branch
      %14 = sbr.rel (0) target = $region5
    $region4: #{tpu_custom_call.1} parent=1 // pred_region
      %s16 = ssub.s32 128, 128
      %17 = vsyncadd [#allocation3], %s16
      %s18 = sshll.u32 [#allocation2], 4
      %s19 = int_to_ptr.vmem [resolvable:$true] %s18
      %24 = dma.hbm_to_vmem [thread:$0]  %s0, 128, %s19, [#allocation3], 64, 64, 4
    $region5: #{tpu_custom_call.1} parent=1 // pred_fallthru
      _
    // Predicated region
    $region6: #{tpu_custom_call.1} parent=1 // pred_check
      _
    $region7: #{tpu_custom_call.1} parent=1 // pred_check_branch
      %26 = sbr.rel (0) target = $region9
    $region8: #{tpu_custom_call.1} parent=1 // pred_region
      %s28 = ssub.s32 1024, 1024
      %29 = vsyncadd [#allocation6], %s28
      %s30 = sshll.u32 [#allocation5], 4
      %s31 = int_to_ptr.vmem [resolvable:$true] %s30
      %36 = dma.hbm_to_vmem [thread:$0]  %s1, 1024, %s31, [#allocation6], 64, 64, 4
    $region9: #{tpu_custom_call.1} parent=1 // pred_fallthru
      _
    // Predicated region
    $region10: #{tpu_custom_call.1} parent=1 // pred_check
      _
    $region11: #{tpu_custom_call.1} parent=1 // pred_check_branch
      %38 = sbr.rel (0) target = $region13
    $region12: #{tpu_custom_call.1} parent=1 // pred_region
      _
    $region13: #{tpu_custom_call.1} parent=1 // pred_fallthru
      _
    // Predicated region
    $region14: #{tpu_custom_call.1} parent=1 // pred_check
      _
    $region15: #{tpu_custom_call.1} parent=1 // pred_check_branch
      %40 = sbr.rel (0) target = $region17
    $region16: #{tpu_custom_call.1} parent=1 // pred_region
      %s42 = ssub.s32 2048, 2048
      %43 = vsyncadd [#allocation6], %s42
      %s44 = sshll.u32 [#allocation7], 4
      %s45 = int_to_ptr.vmem [resolvable:$true] %s44
      %50 = dma.hbm_to_vmem [thread:$0]  %s3, 2048, %s45, [#allocation6], 128, 128, 8
    $region17: #{tpu_custom_call.1} parent=1 // pred_fallthru
      _
    // Predicated region
    $region18: #{tpu_custom_call.1} parent=1 // pred_check
      _
    $region19: #{tpu_custom_call.1} parent=1 // pred_check_branch
      %52 = sbr.rel (0) target = $region21
    $region20: #{tpu_custom_call.1} parent=1 // pred_region
      _
    $region21: #{tpu_custom_call.1} parent=1 // pred_fallthru
      _
    // Predicated region
    $region22: #{tpu_custom_call.1} parent=1 // pred_check
      _
    $region23: #{tpu_custom_call.1} parent=1 // pred_check_branch
      %54 = sbr.rel (0) target = $region25
    $region24: #{tpu_custom_call.1} parent=1 // pred_region
      %55 = dma.done [#allocation3], 128
    $region25: #{tpu_custom_call.1} parent=1 // pred_fallthru
      _
    // Predicated region
    $region26: #{tpu_custom_call.1} parent=1 // pred_check
      _
    $region27: #{tpu_custom_call.1} parent=1 // pred_check_branch
      %57 = sbr.rel (0) target = $region29
    $region28: #{tpu_custom_call.1} parent=1 // pred_region
      %58 = dma.done [#allocation6], 1024
    $region29: #{tpu_custom_call.1} parent=1 // pred_fallthru
      _
    // Predicated region
    $region30: #{tpu_custom_call.1} parent=1 // pred_check
      _
    $region31: #{tpu_custom_call.1} parent=1 // pred_check_branch
      %60 = sbr.rel (0) target = $region33
    $region32: #{tpu_custom_call.1} parent=1 // pred_region
      %61 = dma.done [#allocation6], 2048
    $region33: #{tpu_custom_call.1} parent=1 // pred_fallthru
      _
    %v63 = vld [vmem:[#allocation2] sm:$0xf]
    %v64 = vld [vmem:[#allocation2 + $0x4] sm:$0xf]
    %v65 = vld [vmem:[#allocation5] sm:$0xf]
    %v66 = vld [vmem:[#allocation5 + $0x4] sm:$0xf]
    %v67 = vld [vmem:[#allocation5 + $0x8] sm:$0xf]
    %v68 = vld [vmem:[#allocation5 + $0xc] sm:$0xf]
    %v69 = vld [vmem:[#allocation5 + $0x10] sm:$0xf]
    %v70 = vld [vmem:[#allocation5 + $0x14] sm:$0xf]
    %v71 = vld [vmem:[#allocation5 + $0x18] sm:$0xf]
    %v72 = vld [vmem:[#allocation5 + $0x1c] sm:$0xf]
    %v73 = vld [vmem:[#allocation5 + $0x20] sm:$0xf]
    %v74 = vld [vmem:[#allocation5 + $0x24] sm:$0xf]
    %v75 = vld [vmem:[#allocation5 + $0x28] sm:$0xf]
    %v76 = vld [vmem:[#allocation5 + $0x2c] sm:$0xf]
    %v77 = vld [vmem:[#allocation5 + $0x30] sm:$0xf]
    %v78 = vld [vmem:[#allocation5 + $0x34] sm:$0xf]
    %v79 = vld [vmem:[#allocation5 + $0x38] sm:$0xf]
    %v80 = vld [vmem:[#allocation5 + $0x3c] sm:$0xf]
    %v81 = vld [vmem:[%s2] sm:$0x1]
    %v83 = vlaneseq
    %v84 = vshrl.u32 %v83, 7
    %v85 = vsub.s32 0, %v84
    %v86 = vrot.slane %v81, %v85
    %v90 = vunpack.c.l.b16 %v63
    %v91 = vunpack.c.l.b16 %v64
    %v92 = vpack.c.b16 %v91, %v90
    %v110 = vunpack.c.l.b16 %v65
    %v111 = vunpack.c.l.b16 %v66
    %v112 = vunpack.c.l.b16 %v67
    %v113 = vunpack.c.l.b16 %v68
    %v114 = vunpack.c.l.b16 %v69
    %v115 = vunpack.c.l.b16 %v70
    %v116 = vunpack.c.l.b16 %v71
    %v117 = vunpack.c.l.b16 %v72
    %v118 = vunpack.c.l.b16 %v73
    %v119 = vunpack.c.l.b16 %v74
    %v120 = vunpack.c.l.b16 %v75
    %v121 = vunpack.c.l.b16 %v76
    %v122 = vunpack.c.l.b16 %v77
    %v123 = vunpack.c.l.b16 %v78
    %v124 = vunpack.c.l.b16 %v79
    %v125 = vunpack.c.l.b16 %v80
    %v126 = vpack.c.b16 %v111, %v110
    %v127 = vpack.c.b16 %v113, %v112
    %v128 = vpack.c.b16 %v115, %v114
    %v129 = vpack.c.b16 %v117, %v116
    %v130 = vpack.c.b16 %v119, %v118
    %v131 = vpack.c.b16 %v121, %v120
    %v132 = vpack.c.b16 %v123, %v122
    %v133 = vpack.c.b16 %v125, %v124
    %142 = vmatprep.subr.bf16.mxu0 0
    %143 = vmatpush1.bf16.msra.mxu0 %v126
    %144 = vmatprep.subr.bf16.mxu0 0
    %145 = vmatpush1.bf16.msra.mxu0 %v127
    %146 = vmatprep.subr.bf16.mxu0 0
    %147 = vmatpush1.bf16.msra.mxu0 %v128
    %148 = vmatprep.subr.bf16.mxu0 0
    %149 = vmatpush1.bf16.msra.mxu0 %v129
    %150 = vmatprep.subr.bf16.mxu0 0
    %151 = vmatpush1.bf16.msra.mxu0 %v130
    %152 = vmatprep.subr.bf16.mxu0 0
    %153 = vmatpush1.bf16.msra.mxu0 %v131
    %154 = vmatprep.subr.bf16.mxu0 0
    %155 = vmatpush1.bf16.msra.mxu0 %v132
    %156 = vmatprep.subr.bf16.mxu0 0
    %157 = vmatpush1.bf16.msra.mxu0 %v133
    %158 = vmatprep.subr.bf16.mxu0 0
    %159 = vmatpush1.bf16.msra.mxu0 0
    %160 = vmatprep.subr.bf16.mxu0 0
    %161 = vmatpush1.bf16.msra.mxu0 0
    %162 = vmatprep.subr.bf16.mxu0 0
    %163 = vmatpush1.bf16.msra.mxu0 0
    %164 = vmatprep.subr.bf16.mxu0 0
    %165 = vmatpush1.bf16.msra.mxu0 0
    %166 = vmatprep.subr.bf16.mxu0 0
    %167 = vmatpush1.bf16.msra.mxu0 0
    %168 = vmatprep.subr.bf16.mxu0 0
    %169 = vmatpush1.bf16.msra.mxu0 0
    %170 = vmatprep.subr.bf16.mxu0 0
    %171 = vmatpush1.bf16.msra.mxu0 0
    %172 = vmatprep.subr.bf16.mxu0 0
    %173 = vmatpush1.bf16.msra.mxu0 0
    %174 = vmatprep.mubr.bf16.mxu0 0
    %175 = vmatmul.mubr.bf16.gmra.mrb[0].mxu0 %v92
    %v176 = vpop.f32.mrb[0].mxu0
    %v177 = vadd.f32 %v86, %v176
    %v178 = vpop.f32.mrb[0].mxu0
    %v179 = vpop.f32.mrb[0].mxu0
    %v180 = vadd.f32 %v86, %v179
    %v181 = vpop.f32.mrb[0].mxu0
    %182 = vdwg.mxu0
    %v183 = vmax.f32 %v177, 0.0
    %v184 = vmax.f32 %v180, 0.0
    %v185 = vpack.c.bf16 %v184, %v183
    %v186 = vld [vmem:[#allocation7] sm:$0xff]
    %v187 = vld [vmem:[#allocation7 + $0x8] sm:$0xff]
    %v188 = vld [vmem:[#allocation7 + $0x10] sm:$0xff]
    %v189 = vld [vmem:[#allocation7 + $0x18] sm:$0xff]
    %v190 = vld [vmem:[#allocation7 + $0x20] sm:$0xff]
    %v191 = vld [vmem:[#allocation7 + $0x28] sm:$0xff]
    %v192 = vld [vmem:[#allocation7 + $0x30] sm:$0xff]
    %v193 = vld [vmem:[#allocation7 + $0x38] sm:$0xff]
    %v194 = vld [vmem:[#allocation7 + $0x40] sm:$0xff]
    %v195 = vld [vmem:[#allocation7 + $0x48] sm:$0xff]
    %v196 = vld [vmem:[#allocation7 + $0x50] sm:$0xff]
    %v197 = vld [vmem:[#allocation7 + $0x58] sm:$0xff]
    %v198 = vld [vmem:[#allocation7 + $0x60] sm:$0xff]
    %v199 = vld [vmem:[#allocation7 + $0x68] sm:$0xff]
    %v200 = vld [vmem:[#allocation7 + $0x70] sm:$0xff]
    %v201 = vld [vmem:[#allocation7 + $0x78] sm:$0xff]
    %v202 = vld [vmem:[%s4] sm:$0x3]
    %v204 = vlaneseq
    %v205 = vshrl.u32 %v204, 7
    %v206 = vsub.s32 0, %v205
    %v207 = vrot.slane %v202, %v206
    %v208 = vlaneseq
    %v209 = vshrl.u32 %v208, 7
    %v210 = vsub.s32 1, %v209
    %v211 = vrot.slane %v202, %v210
    %v230 = vunpack.c.l.b16 %v186
    %v231 = vunpack.c.h.b16 %v186
    %v232 = vunpack.c.l.b16 %v187
    %v233 = vunpack.c.h.b16 %v187
    %v234 = vunpack.c.l.b16 %v188
    %v235 = vunpack.c.h.b16 %v188
    %v236 = vunpack.c.l.b16 %v189
    %v237 = vunpack.c.h.b16 %v189
    %v238 = vunpack.c.l.b16 %v190
    %v239 = vunpack.c.h.b16 %v190
    %v240 = vunpack.c.l.b16 %v191
    %v241 = vunpack.c.h.b16 %v191
    %v242 = vunpack.c.l.b16 %v192
    %v243 = vunpack.c.h.b16 %v192
    %v244 = vunpack.c.l.b16 %v193
    %v245 = vunpack.c.h.b16 %v193
    %v246 = vunpack.c.l.b16 %v194
    %v247 = vunpack.c.h.b16 %v194
    %v248 = vunpack.c.l.b16 %v195
    %v249 = vunpack.c.h.b16 %v195
    %v250 = vunpack.c.l.b16 %v196
    %v251 = vunpack.c.h.b16 %v196
    %v252 = vunpack.c.l.b16 %v197
    %v253 = vunpack.c.h.b16 %v197
    %v254 = vunpack.c.l.b16 %v198
    %v255 = vunpack.c.h.b16 %v198
    %v256 = vunpack.c.l.b16 %v199
    %v257 = vunpack.c.h.b16 %v199
    %v258 = vunpack.c.l.b16 %v200
    %v259 = vunpack.c.h.b16 %v200
    %v260 = vunpack.c.l.b16 %v201
    %v261 = vunpack.c.h.b16 %v201
    %v262 = vpack.c.b16 %v232, %v230
    %v263 = vpack.c.b16 %v233, %v231
    %v264 = vpack.c.b16 %v236, %v234
    %v265 = vpack.c.b16 %v237, %v235
    %v266 = vpack.c.b16 %v240, %v238
    %v267 = vpack.c.b16 %v241, %v239
    %v268 = vpack.c.b16 %v244, %v242
    %v269 = vpack.c.b16 %v245, %v243
    %v270 = vpack.c.b16 %v248, %v246
    %v271 = vpack.c.b16 %v249, %v247
    %v272 = vpack.c.b16 %v252, %v250
    %v273 = vpack.c.b16 %v253, %v251
    %v274 = vpack.c.b16 %v256, %v254
    %v275 = vpack.c.b16 %v257, %v255
    %v276 = vpack.c.b16 %v260, %v258
    %v277 = vpack.c.b16 %v261, %v259
    %294 = vmatprep.subr.bf16.mxu0 %v263
    %295 = vmatpush1.bf16.msra.mxu0 %v262
    %296 = vmatprep.subr.bf16.mxu0 %v265
    %297 = vmatpush1.bf16.msra.mxu0 %v264
    %298 = vmatprep.subr.bf16.mxu0 %v267
    %299 = vmatpush1.bf16.msra.mxu0 %v266
    %300 = vmatprep.subr.bf16.mxu0 %v269
    %301 = vmatpush1.bf16.msra.mxu0 %v268
    %302 = vmatprep.subr.bf16.mxu0 %v271
    %303 = vmatpush1.bf16.msra.mxu0 %v270
    %304 = vmatprep.subr.bf16.mxu0 %v273
    %305 = vmatpush1.bf16.msra.mxu0 %v272
    %306 = vmatprep.subr.bf16.mxu0 %v275
    %307 = vmatpush1.bf16.msra.mxu0 %v274
    %308 = vmatprep.subr.bf16.mxu0 %v277
    %309 = vmatpush1.bf16.msra.mxu0 %v276
    %310 = vmatprep.subr.bf16.mxu0 0
    %311 = vmatpush1.bf16.msra.mxu0 0
    %312 = vmatprep.subr.bf16.mxu0 0
    %313 = vmatpush1.bf16.msra.mxu0 0
    %314 = vmatprep.subr.bf16.mxu0 0
    %315 = vmatpush1.bf16.msra.mxu0 0
    %316 = vmatprep.subr.bf16.mxu0 0
    %317 = vmatpush1.bf16.msra.mxu0 0
    %318 = vmatprep.subr.bf16.mxu0 0
    %319 = vmatpush1.bf16.msra.mxu0 0
    %320 = vmatprep.subr.bf16.mxu0 0
    %321 = vmatpush1.bf16.msra.mxu0 0
    %322 = vmatprep.subr.bf16.mxu0 0
    %323 = vmatpush1.bf16.msra.mxu0 0
    %324 = vmatprep.subr.bf16.mxu0 0
    %325 = vmatpush1.bf16.msra.mxu0 0
    %326 = vmatprep.mubr.bf16.mxu0 0
    %327 = vmatmul.mubr.bf16.gmra.mrb[0].mxu0 %v185
    %v328 = vpop.f32.mrb[0].mxu0
    %v329 = vadd.f32 %v207, %v328
    %v330 = vpop.f32.mrb[0].mxu0
    %v331 = vadd.f32 %v211, %v330
    %v332 = vpop.f32.mrb[0].mxu0
    %v333 = vadd.f32 %v207, %v332
    %v334 = vpop.f32.mrb[0].mxu0
    %v335 = vadd.f32 %v211, %v334
    %336 = vdwg.mxu0
    %337 = vst [vmem:[#allocation8] sm:$0xff] %v329
    %338 = vst [vmem:[#allocation8 + $0x8] sm:$0xff] %v331
    %339 = vst [vmem:[#allocation8 + $0x10] sm:$0xff] %v333
    %340 = vst [vmem:[#allocation8 + $0x18] sm:$0xff] %v335
    // Predicated region
    $region34: #{tpu_custom_call.1} parent=1 // pred_check
      _
    $region35: #{tpu_custom_call.1} parent=1 // pred_check_branch
      %342 = sbr.rel (0) target = $region37
    $region36: #{tpu_custom_call.1} parent=1 // pred_region
      %s344 = ssub.s32 512, 512
      %345 = vsyncadd [#allocation4], %s344
      %s346 = sshll.u32 [#allocation8], 4
      %s347 = int_to_ptr.vmem [resolvable:$true] %s346
      %352 = dma.vmem_to_hbm [thread:$0]  %s347, 512, %s5, [#allocation4], 256, 256, 16
    $region37: #{tpu_custom_call.1} parent=1 // pred_fallthru
      _
    // Predicated region
    $region38: #{tpu_custom_call.1} parent=1 // pred_check
      _
    $region39: #{tpu_custom_call.1} parent=1 // pred_check_branch
      %354 = sbr.rel (0) target = $region41
    $region40: #{tpu_custom_call.1} parent=1 // pred_region
      %355 = dma.done [#allocation4], 512
    $region41: #{tpu_custom_call.1} parent=1 // pred_fallthru
      _
    %356 = vsyncpa [#allocation3], 1
    %357 = vsyncpa [#allocation6], 1
    %358 = vsyncpa [#allocation4], 1

</llo_original>
